<compile_context>
chip_gen: v6e
topology: v6e:2x2x1
jax: 0.10.0
libtpu: 0.0.40
codegen_flags: <defaults>
</compile_context>

<pallas_src>
import functools

import jax
import jax.numpy as jnp
from jax.experimental import pallas as pl
from jax.experimental.pallas import tpu as pltpu


# Rows pack along sublanes for sub-32-bit dtypes: round row blocks to these.
_SUBLANE_FOR_ITEMSIZE = {8: 8, 4: 8, 2: 16, 1: 32}


def _physical_vmem_bytes():
    """Best-effort physical VMEM of the current chip (fallback: 64 MiB = v7x)."""
    try:
        v = getattr(pltpu.get_tpu_info(), "vmem_capacity_bytes", None)
        if v:
            return int(v)
    except Exception:
        pass
    return 64 << 20


def _vmem_limit_bytes(block_estimate, phys):
    """Scoped-VMEM limit derived from the actual block footprint (+ headroom)."""
    limit = max(int(block_estimate) + (4 << 20), 16 << 20)
    return int(min(limit, (phys * 15) // 16))


# ----------------------------- main (whole-row) path ------------------------


def _featurenorm_kernel(x_ref, sb_ref, o_ref, *, eps, hw):
    """x_ref: (R, HW) block; sb_ref: (R, 2) = [scale | bias] per row."""
    inv_hw = 1.0 / hw
    # Unbiased variance (torch.std default, correction = 1).  The hw == 1
    # guard only avoids a trace-time divide-by-zero; torch returns NaN there.
    inv_hw_m1 = 1.0 / (hw - 1.0) if hw > 1.0 else 1.0

    # Cast per use instead of keeping a full-block f32 copy live across all
    # three passes (matters for bf16/fp8 inputs; a no-op for f32).
    mean = jnp.sum(x_ref[...].astype(jnp.float32), axis=-1, keepdims=True) * inv_hw
    diff = x_ref[...].astype(jnp.float32) - mean
    var = jnp.sum(diff * diff, axis=-1, keepdims=True) * inv_hw_m1
    std = jnp.sqrt(var)

    # Reference denominator is sqrt(std + eps)  (NOT sqrt(var + eps)).
    inv = jax.lax.rsqrt(std + eps)                     # EUP slot, ~free here

    a = sb_ref[:, 0:1] * inv                           # (R, 1)
    b = sb_ref[:, 1:2] - a * mean                      # (R, 1)
    o_ref[...] = (x_ref[...].astype(jnp.float32) * a + b).astype(o_ref.dtype)


# --------------------------- hw-chunked fallback path ------------------------


def _stats_kernel(x_ref, sb_ref, coef_ref, sum_sc, sq_sc, *, eps, hw, t_hw):
    """Pass 1: accumulate per-row sum / sum-of-squares over hw chunks, then
    finalize per-row affine coefficients (a, b) so pass 2 is a pure FMA."""
    k = pl.program_id(1)

    @pl.when(k == 0)
    def _():
        sum_sc[...] = jnp.zeros_like(sum_sc)
        sq_sc[...] = jnp.zeros_like(sq_sc)

    x = x_ref[...].astype(jnp.float32)                 # (R, t_hw)
    if hw % t_hw != 0:
        # Mask the padded tail of the last hw chunk (padding holds garbage).
        lane = jax.lax.broadcasted_iota(jnp.int32, x.shape, 1) + k * t_hw
        x = jnp.where(lane < hw, x, 0.0)
    sum_sc[...] += jnp.sum(x, axis=-1, keepdims=True)
    sq_sc[...] += jnp.sum(x * x, axis=-1, keepdims=True)

    @pl.when(k == pl.num_programs(1) - 1)
    def _():
        inv_hw = 1.0 / hw
        inv_hw_m1 = 1.0 / (hw - 1.0) if hw > 1.0 else 1.0
        mean = sum_sc[...] * inv_hw
        # sum((x - mean)^2) == sumsq - hw * mean^2 ; clamp for safety.
        var = jnp.maximum(sq_sc[...] - sum_sc[...] * mean, 0.0) * inv_hw_m1
        inv = jax.lax.rsqrt(jnp.sqrt(var) + eps)
        a = sb_ref[:, 0:1] * inv
        b = sb_ref[:, 1:2] - a * mean
        coef_ref[:, 0:1] = a
        coef_ref[:, 1:2] = b


def _apply_kernel(x_ref, coef_ref, o_ref):
    """Pass 2: out = x * a + b."""
    a = coef_ref[:, 0:1]
    b = coef_ref[:, 1:2]
    o_ref[...] = (x_ref[...].astype(jnp.float32) * a + b).astype(o_ref.dtype)


def _feature_norm_hw_chunked(x2, sb, *, eps, rows, hw, sub, isz_in, isz_out,
                             budget, phys):
    R = min(rows, sub)
    per_elem = 2 * isz_in + 2 * isz_out + 8            # dbl-buffered io + f32 temps
    t = budget // max(1, R * per_elem)
    t = max(128, (t // 128) * 128)                     # lane-dense multiple of 128
    t_hw = min(t, hw)

    rb = pl.cdiv(rows, R)
    kb = pl.cdiv(hw, t_hw)

    est = R * t_hw * per_elem + R * 128 * 4 * 8
    limit = _vmem_limit_bytes(est, phys)

    stats = functools.partial(_stats_kernel, eps=float(eps), hw=hw, t_hw=t_hw)
    coef = pl.pallas_call(
        stats,
        out_shape=jax.ShapeDtypeStruct((rows, 2), jnp.float32),
        grid_spec=pltpu.PrefetchScalarGridSpec(
            num_scalar_prefetch=0,
            grid=(rb, kb),
            in_specs=[
                pl.BlockSpec((R, t_hw), lambda i, k: (i, k)),
                pl.BlockSpec((R, 2), lambda i, k: (i, 0)),
            ],
            out_specs=pl.BlockSpec((R, 2), lambda i, k: (i, 0)),
            scratch_shapes=[
                pltpu.VMEM((R, 1), jnp.float32),       # running sum
                pltpu.VMEM((R, 1), jnp.float32),       # running sum of squares
            ],
        ),
        compiler_params=pltpu.CompilerParams(
            dimension_semantics=("parallel", "arbitrary"),
            vmem_limit_bytes=limit,
        ),
    )(x2, sb)

    out2 = pl.pallas_call(
        _apply_kernel,
        out_shape=jax.ShapeDtypeStruct((rows, hw), x2.dtype),
        grid_spec=pltpu.PrefetchScalarGridSpec(
            num_scalar_prefetch=0,
            grid=(rb, kb),
            in_specs=[
                pl.BlockSpec((R, t_hw), lambda i, k: (i, k)),
                pl.BlockSpec((R, 2), lambda i, k: (i, 0)),
            ],
            out_specs=pl.BlockSpec((R, t_hw), lambda i, k: (i, k)),
        ),
        compiler_params=pltpu.CompilerParams(
            dimension_semantics=("parallel", "parallel"),
            vmem_limit_bytes=limit,
        ),
    )(x2, coef)

    return out2


# ----------------------------------- wrapper --------------------------------


def feature_norm(x, scale, bias, *, eps=0.001, max_vmem_bytes=None):
    """x: (N, C, H, W); scale/bias: (1, C, 1, 1). Returns x's shape/dtype."""
    N, C, H, W = x.shape
    rows = N * C
    hw = H * W

    isz_in = jnp.dtype(x.dtype).itemsize
    isz_out = isz_in
    sub = _SUBLANE_FOR_ITEMSIZE.get(isz_in, 8)

    phys = _physical_vmem_bytes()
    budget = min(int(max_vmem_bytes), phys) if max_vmem_bytes else phys
    budget = (budget * 3) // 4              # headroom for Mosaic internal scratch

    # Lane-dense 2-D view: each (n, c) spatial plane is one row.
    x2 = x.reshape(rows, hw)

    # Pack per-channel params into one per-row (rows, 2) f32 array:
    # column 0 = scale, column 1 = bias  ->  single (R, 2) block per step.
    scale_rows = jnp.broadcast_to(
        scale.reshape(1, C).astype(jnp.float32), (N, C)).reshape(rows)
    bias_rows = jnp.broadcast_to(
        bias.reshape(1, C).astype(jnp.float32), (N, C)).reshape(rows)
    sb = jnp.stack([scale_rows, bias_rows], axis=-1)           # (rows, 2)

    # f32-equivalent per-row footprint of one pipeline step:
    # double-buffered input + output blocks plus ~2 f32 temps in-kernel.
    per_row = hw * (2 * isz_in + 2 * isz_out + 8)
    min_rows = min(rows, sub)

    if per_row * min_rows > budget and hw > 128:
        # Even a minimal whole-row block does not fit: chunk the hw axis.
        out2 = _feature_norm_hw_chunked(
            x2, sb, eps=eps, rows=rows, hw=hw, sub=sub,
            isz_in=isz_in, isz_out=isz_out, budget=budget, phys=phys)
        return out2.reshape(N, C, H, W)

    # ---- main (whole-row) path ----
    r_budget = max(min_rows, budget // per_row)
    # Keep the grid at >= 2-4 steps when splittable so both v7x TCs get work
    # (pure benefit there; ~0.35 us/step overhead is negligible on v5e/v6e).
    steps_possible = rows // sub
    if steps_possible >= 4:
        min_steps = 4
    elif steps_possible >= 2:
        min_steps = 2
    else:
        min_steps = 1
    r = min(rows, r_budget, pl.cdiv(rows, min_steps))
    if r >= rows:
        R = rows                                   # full extent: always legal
    else:
        R = max((r // sub) * sub, min_rows)        # dtype-aware sublane multiple

    grid = (pl.cdiv(rows, R),)
    est = R * hw * (2 * isz_in + 2 * isz_out + 8) + R * 128 * 4 * 2
    kernel = functools.partial(_featurenorm_kernel, eps=float(eps), hw=float(hw))

    out2 = pl.pallas_call(
        kernel,
        out_shape=jax.ShapeDtypeStruct((rows, hw), x.dtype),
        grid_spec=pltpu.PrefetchScalarGridSpec(
            num_scalar_prefetch=0,
            grid=grid,
            in_specs=[
                pl.BlockSpec((R, hw), lambda i: (i, 0)),
                pl.BlockSpec((R, 2), lambda i: (i, 0)),
            ],
            out_specs=pl.BlockSpec((R, hw), lambda i: (i, 0)),
        ),
        compiler_params=pltpu.CompilerParams(
            dimension_semantics=("parallel",),
            vmem_limit_bytes=_vmem_limit_bytes(est, phys),
        ),
    )(x2, sb)

    # TODO(synk): for hw < 128 feature maps (e.g. 7x7), pack ceil(128/hw)
    # planes per block row with a segmented reduction to avoid masked stores;
    # the current layout is already lane-dense for hw >= 128.
    return out2.reshape(N, C, H, W)


# ---------------------------------- testing ---------------------------------


def _reference(x, scale, bias, eps=0.001):
    # Pure-JAX reference mirroring the PyTorch forward (unbiased std).
    mean = jnp.mean(x, axis=(2, 3), keepdims=True)
    n = x.shape[2] * x.shape[3]
    var = jnp.sum((x - mean) ** 2, axis=(2, 3), keepdims=True) / (n - 1)
    std = jnp.sqrt(var)
    return scale * ((x - mean) / jnp.sqrt(std + eps)) + bias


if __name__ == "__main__":
    key0, key1 = jax.random.split(jax.random.PRNGKey(0))

    # Primary small case (module defaults: rank 4, feature_index 1, reduce (2,3)).
    N, C, H, W = 2, 4, 16, 16
    x = jax.random.normal(key0, (N, C, H, W), dtype=jnp.float32)
    scale = jnp.ones((1, C, 1, 1), dtype=jnp.float32)    # nn.Parameter(torch.ones)
    bias = jnp.zeros((1, C, 1, 1), dtype=jnp.float32)    # nn.Parameter(torch.zeros)

    out = jax.block_until_ready(feature_norm(x, scale, bias, eps=0.001))
    ref = _reference(x, scale, bias, eps=0.001)
    assert out.shape == (N, C, H, W)
    assert jnp.allclose(out, ref, atol=1e-5, rtol=1e-5)

    # Also exercise (a) a non-multiple-of-128 spatial size on the main path and
    # (b) the hw-chunked fallback (used for huge planes on small-VMEM chips
    # like v7x) by forcing a tiny budget, including the masked tail chunk.
    N2, C2, H2, W2 = 2, 3, 15, 20
    x2 = jax.random.normal(key1, (N2, C2, H2, W2), dtype=jnp.float32)
    scale2 = 1.0 + 0.1 * jnp.arange(C2, dtype=jnp.float32).reshape(1, C2, 1, 1)
    bias2 = 0.05 * jnp.arange(C2, dtype=jnp.float32).reshape(1, C2, 1, 1)

    out2a = jax.block_until_ready(feature_norm(x2, scale2, bias2, eps=0.001))
    out2b = jax.block_until_ready(
        feature_norm(x2, scale2, bias2, eps=0.001, max_vmem_bytes=8 << 10))
    ref2 = _reference(x2, scale2, bias2, eps=0.001)
    assert jnp.allclose(out2a, ref2, atol=1e-5, rtol=1e-5)
    assert jnp.allclose(out2b, ref2, atol=1e-5, rtol=1e-5)

    print("KERNEL_OK")
</pallas_src>

<mosaic_0001>
module attributes {stable_mosaic.version = 11 : i64} {
  func.func @_featurenorm_kernel(%arg0: i32, %arg1: memref<8x256xf32, #tpu.memory_space<vmem>>, %arg2: memref<8x2xf32, #tpu.memory_space<vmem>>, %arg3: memref<8x256xf32, #tpu.memory_space<vmem>>) attributes {dimension_semantics = [#tpu.dimension_semantics<parallel>], iteration_bounds = array<i64: 1>, scalar_prefetch = 0 : i64, scratch_operands = 0 : i64, tpu.core_type = #tpu.core_type<tc>, window_params = [{transform_indices = @transform_0, window_bounds = array<i64: 8, 256>}, {transform_indices = @transform_1, window_bounds = array<i64: 8, 2>}, {transform_indices = @transform_2, window_bounds = array<i64: 8, 256>}]} {
    %c0 = arith.constant 0 : index
    %c0_0 = arith.constant 0 : index
    %0 = vector.load %arg1[%c0, %c0_0] : memref<8x256xf32, #tpu.memory_space<vmem>>, vector<8x256xf32>
    %cst = arith.constant dense<0.000000e+00> : vector<8xf32>
    %1 = vector.multi_reduction <add>, %0, %cst [1] : vector<8x256xf32> to vector<8xf32>
    %2 = vector.shape_cast %1 : vector<8xf32> to vector<8x1xf32>
    %cst_1 = arith.constant 3.906250e-03 : f32
    %3 = vector.broadcast %cst_1 : f32 to vector<8x1xf32>
    %4 = arith.mulf %2, %3 : vector<8x1xf32>
    %c0_2 = arith.constant 0 : index
    %c0_3 = arith.constant 0 : index
    %5 = vector.load %arg1[%c0_2, %c0_3] : memref<8x256xf32, #tpu.memory_space<vmem>>, vector<8x256xf32>
    %6 = vector.broadcast %4 : vector<8x1xf32> to vector<8x256xf32>
    %7 = arith.subf %5, %6 : vector<8x256xf32>
    %8 = arith.mulf %7, %7 : vector<8x256xf32>
    %cst_4 = arith.constant dense<0.000000e+00> : vector<8xf32>
    %9 = vector.multi_reduction <add>, %8, %cst_4 [1] : vector<8x256xf32> to vector<8xf32>
    %10 = vector.shape_cast %9 : vector<8xf32> to vector<8x1xf32>
    %cst_5 = arith.constant 0.00392156886 : f32
    %11 = vector.broadcast %cst_5 : f32 to vector<8x1xf32>
    %12 = arith.mulf %10, %11 : vector<8x1xf32>
    %13 = math.sqrt %12 : vector<8x1xf32>
    %cst_6 = arith.constant 1.000000e-03 : f32
    %14 = vector.broadcast %cst_6 : f32 to vector<8x1xf32>
    %15 = arith.addf %13, %14 : vector<8x1xf32>
    %16 = math.rsqrt %15 : vector<8x1xf32>
    %c0_7 = arith.constant 0 : index
    %c0_8 = arith.constant 0 : index
    %17 = vector.load %arg2[%c0_7, %c0_8] : memref<8x2xf32, #tpu.memory_space<vmem>>, vector<8x1xf32>
    %18 = arith.mulf %17, %16 : vector<8x1xf32>
    %c0_9 = arith.constant 0 : index
    %c1 = arith.constant 1 : index
    %19 = vector.load %arg2[%c0_9, %c1] : memref<8x2xf32, #tpu.memory_space<vmem>>, vector<8x1xf32>
    %20 = arith.mulf %18, %4 : vector<8x1xf32>
    %21 = arith.subf %19, %20 : vector<8x1xf32>
    %c0_10 = arith.constant 0 : index
    %c0_11 = arith.constant 0 : index
    %22 = vector.load %arg1[%c0_10, %c0_11] : memref<8x256xf32, #tpu.memory_space<vmem>>, vector<8x256xf32>
    %23 = vector.broadcast %18 : vector<8x1xf32> to vector<8x256xf32>
    %24 = arith.mulf %22, %23 : vector<8x256xf32>
    %25 = vector.broadcast %21 : vector<8x1xf32> to vector<8x256xf32>
    %26 = arith.addf %24, %25 : vector<8x256xf32>
    %c0_12 = arith.constant 0 : index
    %c0_13 = arith.constant 0 : index
    %27 = vector.load %arg3[%c0_12, %c0_13] : memref<8x256xf32, #tpu.memory_space<vmem>>, vector<8x256xf32>
    tpu.vector_store %arg3[%c0_12, %c0_13], %26 {strides = array<i32>} : memref<8x256xf32, #tpu.memory_space<vmem>>, vector<8x256xf32>,
    return
  }
  func.func @transform_0(%arg0: i32) -> (i32, i32) {
    %c0_i32 = arith.constant 0 : i32
    %c0_i32_0 = arith.constant 0 : i32
    return %arg0, %c0_i32 : i32, i32
  }
  func.func @transform_1(%arg0: i32) -> (i32, i32) {
    %c0_i32 = arith.constant 0 : i32
    %c0_i32_0 = arith.constant 0 : i32
    return %arg0, %c0_i32 : i32, i32
  }
  func.func @transform_2(%arg0: i32) -> (i32, i32) {
    %c0_i32 = arith.constant 0 : i32
    %c0_i32_0 = arith.constant 0 : i32
    return %arg0, %c0_i32 : i32, i32
  }
}

</mosaic_0001>

<llo_original>
// kernel: tpu_custom_call.1
$region0: #{tpu_custom_call.1}
  #allocation0 [shape = 'u32[]', space=smem, size = 0x4, offset = 0x4, fixed_abs, tag = 'smem constant byte address 0x4 - core index']
  #allocation1 [shape = 'u32[144,128]{1,0:T(1,128)}', space=vmem, size = 0x12000, scoped, tag = 'internal scratch']
  %s0 = inlined_call_operand.hbm [shape: f32[8,256], index: 0, kind: input, shape index: {}]
  %s1 = inlined_call_operand.vmem [shape: f32[8,2], index: 1, kind: input, shape index: {}]
  %s2 = inlined_call_operand.hbm [shape: f32[8,256], index: 2, kind: output, shape index: {}]
  %s3 = sld [smem:[#allocation0]]
  $region22: #{tpu_custom_call.1} parent=0
    _
  %s5 = ssub.s32 1, %s3
  %s6 = scalar_select 0, %s5, %s3
  $region1: #{tpu_custom_call.1} parent=0
    #allocation2 [shape = 'u8[8192]{0}', space=vmem, size = 0x2000, scoped, tag = 'input window, operand 0, single buffered']
    #allocation3 [shape = 's32[1]{0}', space=sflag, size = 0x4, scoped, tag = 'scoped memory for tpu_custom_call.1']
    #allocation4 [shape = 's32[1]{0}', space=sflag, size = 0x4, scoped, tag = 'scoped memory for tpu_custom_call.1']
    #allocation5 [shape = 'u8[8192]{0}', space=vmem, size = 0x2000, scoped, tag = 'output window, operand 0, single buffered']
    %7 = vsyncpa [#allocation3], 0
    %8 = vsyncpa [#allocation4], 0
    // Predicated region
    $region2: #{tpu_custom_call.1} parent=1 // pred_check
      _
    $region3: #{tpu_custom_call.1} parent=1 // pred_check_branch
      %10 = sbr.rel (0) target = $region5
    $region4: #{tpu_custom_call.1} parent=1 // pred_region
      %s12 = ssub.s32 256, 256
      %13 = vsyncadd [#allocation3], %s12
      %s15 = sshll.u32 [#allocation2], 4
      %s16 = int_to_ptr.vmem [resolvable:$true] %s15
      %18 = dma.hbm_to_vmem [thread:$0]  %s0, 256, %s16, [#allocation3]
    $region5: #{tpu_custom_call.1} parent=1 // pred_fallthru
      _
    // Predicated region
    $region6: #{tpu_custom_call.1} parent=1 // pred_check
      _
    $region7: #{tpu_custom_call.1} parent=1 // pred_check_branch
      %20 = sbr.rel (0) target = $region9
    $region8: #{tpu_custom_call.1} parent=1 // pred_region
      _
    $region9: #{tpu_custom_call.1} parent=1 // pred_fallthru
      _
    // Predicated region
    $region10: #{tpu_custom_call.1} parent=1 // pred_check
      _
    $region11: #{tpu_custom_call.1} parent=1 // pred_check_branch
      %22 = sbr.rel (0) target = $region13
    $region12: #{tpu_custom_call.1} parent=1 // pred_region
      %23 = dma.done [#allocation3], 256
    $region13: #{tpu_custom_call.1} parent=1 // pred_fallthru
      _
    %v24 = vld [vmem:[#allocation2] sm:$0xff]
    %v25 = vld [vmem:[#allocation2 + $0x8] sm:$0xff]
    %v26 = vadd.f32 %v24, %v25
    %27 = vadd.xlane.f32.xlu0 %v26
    %v28 = vpop.xlane.xlu0 %27
    %v29 = vmul.f32 %v28, 0.00390625
    %v30 = vsub.f32 %v24, %v29
    %v31 = vsub.f32 %v25, %v29
    %v32 = vmul.f32 %v30, %v30
    %v33 = vmul.f32 %v31, %v31
    %v34 = vadd.f32 %v32, %v33
    %35 = vadd.xlane.f32.xlu0 %v34
    %v36 = vpop.xlane.xlu0 %35
    %v37 = vmul.f32 %v36, 0.003921569
    %v38 = vrsqrt.pop %v37
    %v39 = vmul.f32 %v37, %v38
    %vm40 = vcmp.eq.f32.partialorder %v37, inf
    %v41 = vsel %vm40, %v37, %v39
    %vm42 = vcmp.eq.f32.partialorder %v37, 0.0
    %v43 = vand.u32 %v37, 2147483648
    %v44 = vsel %vm42, %v43, %v41
    %v45 = vadd.f32 %v44, 0.001
    %v46 = vrsqrt.pop %v45
    %v47 = vld [vmem:[%s1] sm:$0xff]
    %v48 = vmul.f32 %v47, %v46
    %v49 = vmul.f32 %v48, %v29
    %51 = vrot.lane.b32.xlu0 %v49, 1
    %v52 = vpop.permute.xlu0 %51
    %v54 = vsub.f32 %v47, %v52
    %56 = vset.pattern.permute.xlu0 0
    %57 = vperm.xlu0 %56, %v48
    %v58 = vpop.permute.xlu0 %57
    %v60 = vmul.f32 %v24, %v58
    %v61 = vmul.f32 %v25, %v58
    %63 = vset.pattern.permute.xlu0 1
    %64 = vperm.xlu0 %63, %v54
    %v65 = vpop.permute.xlu0 %64
    %v67 = vadd.f32 %v60, %v65
    %v68 = vadd.f32 %v61, %v65
    %69 = vst [vmem:[#allocation5] sm:$0xff] %v67
    %70 = vst [vmem:[#allocation5 + $0x8] sm:$0xff] %v68
    // Predicated region
    $region14: #{tpu_custom_call.1} parent=1 // pred_check
      _
    $region15: #{tpu_custom_call.1} parent=1 // pred_check_branch
      %72 = sbr.rel (0) target = $region17
    $region16: #{tpu_custom_call.1} parent=1 // pred_region
      %s74 = ssub.s32 256, 256
      %75 = vsyncadd [#allocation4], %s74
      %s77 = sshll.u32 [#allocation5], 4
      %s78 = int_to_ptr.vmem [resolvable:$true] %s77
      %80 = dma.vmem_to_hbm [thread:$0]  %s78, 256, %s2, [#allocation4]
    $region17: #{tpu_custom_call.1} parent=1 // pred_fallthru
      _
    // Predicated region
    $region18: #{tpu_custom_call.1} parent=1 // pred_check
      _
    $region19: #{tpu_custom_call.1} parent=1 // pred_check_branch
      %82 = sbr.rel (0) target = $region21
    $region20: #{tpu_custom_call.1} parent=1 // pred_region
      %83 = dma.done [#allocation4], 256
    $region21: #{tpu_custom_call.1} parent=1 // pred_fallthru
      _
    %84 = vsyncpa [#allocation3], 1
    %85 = vsyncpa [#allocation4], 1

</llo_original>
